<compile_context>
chip_gen: v7x
topology: tpu7x:2x2x1
jax: 0.10.0
libtpu: 0.0.40
codegen_flags: <defaults>
</compile_context>

<pallas_src>
import jax
import jax.numpy as jnp
from jax.experimental import pallas as pl
from jax.experimental.pallas import tpu as pltpu


def _conv_stats_kernel(w_ref, x_ref, y_ref, sum_ref, ssq_ref):
    """Pass 1: conv GEMM tile + streaming per-channel sum / sum-of-squares.

    w_ref:   (C_out, K)   bf16 flattened conv weight (resident across grid)
    x_ref:   (K, tM)      bf16 im2col tile (M streamed on the 'arbitrary' axis)
    y_ref:   (C_out, tM)  f32 pre-BN activations (written per tile, lane-dense)
    sum_ref: (C_out, 1)   f32 accumulator (revisited block)
    ssq_ref: (C_out, 1)   f32 accumulator (revisited block)
    """
    @pl.when(pl.program_id(0) == 0)
    def _():
        sum_ref[...] = jnp.zeros_like(sum_ref)
        ssq_ref[...] = jnp.zeros_like(ssq_ref)

    # Single MXU push per tile, bf16 operands with f32 accumulation.
    y = jnp.dot(w_ref[...], x_ref[...], preferred_element_type=jnp.float32)
    y_ref[...] = y

    # Lane-dense per-channel reductions (XLU), accumulated across M tiles.
    sum_ref[...] += jnp.sum(y, axis=1, keepdims=True)
    ssq_ref[...] += jnp.sum(y * y, axis=1, keepdims=True)


def _bn_relu_kernel(y_ref, scale_ref, shift_ref, o_ref):
    """Pass 2: out = relu(y * scale + shift), lane-dense over M."""
    o_ref[...] = jnp.maximum(
        y_ref[...] * scale_ref[...] + shift_ref[...], 0.0).astype(o_ref.dtype)


def basic_conv2d(x_nchw, w_oihw, gamma, beta, *, stride=1, padding=0, eps=1e-3,
                 block_m=None):
    n, c_in, h, w = x_nchw.shape
    c_out, _, kh, kw = w_oihw.shape

    # NCHW -> NHWC, spatial zero-pad (plain XLA).
    x = jnp.transpose(x_nchw, (0, 2, 3, 1))
    xp = jnp.pad(x, ((0, 0), (padding, padding), (padding, padding), (0, 0)))
    h_pad, w_pad = h + 2 * padding, w + 2 * padding
    h_out = (h_pad - kh) // stride + 1
    w_out = (w_pad - kw) // stride + 1
    m = n * h_out * w_out
    k = kh * kw * c_in

    # im2col in the wrapper (plain XLA).
    # TODO(synk): for Inception-scale shapes replace with an in-kernel halo
    # block gather (KH*KW shifted matmuls into a VMEM accumulator) to avoid the
    # x(KH*KW) HBM blowup + the (M,K)->(K,M) transpose.
    taps = []
    for ih in range(kh):
        for iw in range(kw):
            taps.append(
                xp[:, ih:ih + stride * (h_out - 1) + 1:stride,
                   iw:iw + stride * (w_out - 1) + 1:stride, :])  # (N,Ho,Wo,C_in)
    patches = jnp.concatenate(taps, axis=-1)            # (N, Ho, Wo, K)
    patches_t = patches.reshape(m, k).T                 # (K, M)

    # M-tile size: largest lane-dense tile that fits a conservative VMEM budget,
    # capped at 2048 for v7x's 64 MiB VMEM (review item), >= 128 lanes.
    if block_m is None:
        budget = 24 * 1024 * 1024
        bytes_per_col = 2 * (2 * k) + 2 * (4 * c_out)   # dbl-buf bf16 patch + f32 y
        block_m = (budget // max(bytes_per_col, 1)) // 128 * 128
        block_m = max(128, min(2048, block_m))
    block_m = max(128, (block_m // 128) * 128)
    block_m = min(block_m, pl.cdiv(m, 128) * 128)
    m_pad = pl.cdiv(m, block_m) * block_m
    num_m = m_pad // block_m

    # Zero-pad M to a tile multiple; padded columns yield y == 0 (no conv bias)
    # so they do not pollute the statistics when dividing by the true M.
    patches_t = jnp.pad(patches_t, ((0, 0), (0, m_pad - m)))

    # bf16 MXU operands (halves DMA bytes of the dominant (K, M) operand).
    patches_bf = patches_t.astype(jnp.bfloat16)
    w_flat_t = jnp.transpose(w_oihw, (2, 3, 1, 0)).reshape(k, c_out).T
    w_bf = w_flat_t.astype(jnp.bfloat16)

    vmem_limit = 48 * 1024 * 1024   # raise scoped VMEM, stay under v7x physical

    # ---- Pass 1: conv GEMM + streaming BN statistics (arbitrary M axis). ----
    flops = 2 * c_out * k * m_pad + 3 * c_out * m_pad
    bytes_accessed = (c_out * k * 2 + k * m_pad * 2 + c_out * m_pad * 4
                      + 2 * c_out * 4)
    y, y_sum, y_ssq = pl.pallas_call(
        _conv_stats_kernel,
        out_shape=(
            jax.ShapeDtypeStruct((c_out, m_pad), jnp.float32),
            jax.ShapeDtypeStruct((c_out, 1), jnp.float32),
            jax.ShapeDtypeStruct((c_out, 1), jnp.float32),
        ),
        grid=(num_m,),
        in_specs=[
            pl.BlockSpec((c_out, k), lambda i: (0, 0)),
            pl.BlockSpec((k, block_m), lambda i: (0, i)),
        ],
        out_specs=(
            pl.BlockSpec((c_out, block_m), lambda i: (0, i)),
            pl.BlockSpec((c_out, 1), lambda i: (0, 0)),
            pl.BlockSpec((c_out, 1), lambda i: (0, 0)),
        ),
        compiler_params=pltpu.CompilerParams(
            dimension_semantics=("arbitrary",),
            vmem_limit_bytes=vmem_limit),
        cost_estimate=pl.CostEstimate(
            flops=flops, transcendentals=0, bytes_accessed=bytes_accessed),
    )(w_bf, patches_bf)

    # Tiny per-channel BN parameter math in plain XLA (single-pass variance,
    # biased, matches PyTorch train-mode BN normalization with eps=1e-3).
    inv_count = 1.0 / float(m)
    mean = y_sum * inv_count
    var = jnp.maximum(y_ssq * inv_count - mean * mean, 0.0)
    scale = gamma.reshape(c_out, 1).astype(jnp.float32) * jax.lax.rsqrt(var + eps)
    shift = beta.reshape(c_out, 1).astype(jnp.float32) - mean * scale

    # ---- Pass 2: normalize + ReLU ("parallel" M axis -> both v7x TCs). ----
    out_cm = pl.pallas_call(
        _bn_relu_kernel,
        out_shape=jax.ShapeDtypeStruct((c_out, m_pad), x_nchw.dtype),
        grid=(num_m,),
        in_specs=[
            pl.BlockSpec((c_out, block_m), lambda i: (0, i)),
            pl.BlockSpec((c_out, 1), lambda i: (0, 0)),
            pl.BlockSpec((c_out, 1), lambda i: (0, 0)),
        ],
        out_specs=pl.BlockSpec((c_out, block_m), lambda i: (0, i)),
        compiler_params=pltpu.CompilerParams(
            dimension_semantics=("parallel",),
            vmem_limit_bytes=vmem_limit),
    )(y, scale, shift)

    # Channel-major -> NCHW (module semantics).
    # TODO(synk): defer/drop this transpose when the consumer is the next fused
    # op; it is a full extra HBM round trip of the activation.
    return out_cm[:, :m].reshape(c_out, n, h_out, w_out).transpose(1, 0, 2, 3)


def _reference(x, w, gamma, beta, *, stride, padding, eps):
    y = jax.lax.conv_general_dilated(
        x, w, (stride, stride), [(padding, padding), (padding, padding)],
        dimension_numbers=("NCHW", "OIHW", "NCHW"))
    mean = jnp.mean(y, axis=(0, 2, 3), keepdims=True)
    var = jnp.mean((y - mean) ** 2, axis=(0, 2, 3), keepdims=True)
    y = (y - mean) * jax.lax.rsqrt(var + eps)
    y = y * gamma.reshape(1, -1, 1, 1) + beta.reshape(1, -1, 1, 1)
    return jnp.maximum(y, 0.0)


if __name__ == "__main__":
    # BasicConv2d(in_planes=4, out_planes=8, kernel_size=3, stride=1, padding=1)
    in_planes, out_planes, kernel_size, stride, padding = 4, 8, 3, 1, 1
    eps = 1e-3

    key = jax.random.PRNGKey(0)
    kx, kw = jax.random.split(key)
    x = jax.random.normal(kx, (2, in_planes, 16, 16), dtype=jnp.float32)

    # Deterministic param init (Conv2d default-style uniform; BN gamma=1, beta=0).
    fan_in = in_planes * kernel_size * kernel_size
    bound = 1.0 / (fan_in ** 0.5)
    w = jax.random.uniform(kw, (out_planes, in_planes, kernel_size, kernel_size),
                           minval=-bound, maxval=bound, dtype=jnp.float32)
    gamma = jnp.ones((out_planes,), jnp.float32)
    beta = jnp.zeros((out_planes,), jnp.float32)

    # block_m=128 -> 4 M-tiles so the streaming-stats / pipelined path is
    # actually exercised at this toy size (auto-pick would use one tile).
    out = basic_conv2d(x, w, gamma, beta, stride=stride, padding=padding,
                       eps=eps, block_m=128)
    out = jax.block_until_ready(out)

    ref = _reference(x, w, gamma, beta, stride=stride, padding=padding, eps=eps)
    assert out.shape == ref.shape == (2, out_planes, 16, 16)
    # bf16 MXU operands -> relaxed tolerance; BN renormalization keeps the
    # error near bf16-epsilon scale in normalized units.
    assert jnp.allclose(out, ref, rtol=5e-2, atol=5e-2), "mismatch vs JAX reference"

    print("KERNEL_OK")
</pallas_src>

<mosaic_0001>
module attributes {stable_mosaic.version = 11 : i64} {
  func.func @_conv_stats_kernel(%arg0: i32, %arg1: memref<8x36xbf16, #tpu.memory_space<vmem>>, %arg2: memref<36x128xbf16, #tpu.memory_space<vmem>>, %arg3: memref<8x128xf32, #tpu.memory_space<vmem>>, %arg4: memref<8x1xf32, #tpu.memory_space<vmem>>, %arg5: memref<8x1xf32, #tpu.memory_space<vmem>>) attributes {dimension_semantics = [#tpu.dimension_semantics<arbitrary>], iteration_bounds = array<i64: 4>, scalar_prefetch = 0 : i64, scratch_operands = 0 : i64, tpu.core_type = #tpu.core_type<tc>, window_params = [{pipeline_mode = #tpu.pipeline_mode<synchronous>, transform_indices = @transform_0, window_bounds = array<i64: 8, 36>}, {transform_indices = @transform_1, window_bounds = array<i64: 36, 128>}, {transform_indices = @transform_2, window_bounds = array<i64: 8, 128>}, {pipeline_mode = #tpu.pipeline_mode<synchronous>, transform_indices = @transform_3, window_bounds = array<i64: 8, 1>}, {pipeline_mode = #tpu.pipeline_mode<synchronous>, transform_indices = @transform_4, window_bounds = array<i64: 8, 1>}]} {
    %c0_i32 = arith.constant 0 : i32
    %0 = arith.cmpi eq, %arg0, %c0_i32 : i32
    %1 = arith.extui %0 : i1 to i32
    %c0_i32_0 = arith.constant 0 : i32
    %2 = arith.cmpi ne, %1, %c0_i32_0 : i32
    scf.if %2 {
      %cst_16 = arith.constant 0.000000e+00 : f32
      %18 = vector.broadcast %cst_16 : f32 to vector<8x1xf32>
      %c0_17 = arith.constant 0 : index
      %c0_18 = arith.constant 0 : index
      %19 = vector.load %arg4[%c0_17, %c0_18] : memref<8x1xf32, #tpu.memory_space<vmem>>, vector<8x1xf32>
      tpu.vector_store %arg4[%c0_17, %c0_18], %18 {strides = array<i32>} : memref<8x1xf32, #tpu.memory_space<vmem>>, vector<8x1xf32>,
      %cst_19 = arith.constant 0.000000e+00 : f32
      %20 = vector.broadcast %cst_19 : f32 to vector<8x1xf32>
      %c0_20 = arith.constant 0 : index
      %c0_21 = arith.constant 0 : index
      %21 = vector.load %arg5[%c0_20, %c0_21] : memref<8x1xf32, #tpu.memory_space<vmem>>, vector<8x1xf32>
      tpu.vector_store %arg5[%c0_20, %c0_21], %20 {strides = array<i32>} : memref<8x1xf32, #tpu.memory_space<vmem>>, vector<8x1xf32>,
    } else {
    }
    %c0 = arith.constant 0 : index
    %c0_1 = arith.constant 0 : index
    %3 = vector.load %arg1[%c0, %c0_1] : memref<8x36xbf16, #tpu.memory_space<vmem>>, vector<8x36xbf16>
    %c0_2 = arith.constant 0 : index
    %c0_3 = arith.constant 0 : index
    %4 = vector.load %arg2[%c0_2, %c0_3] : memref<36x128xbf16, #tpu.memory_space<vmem>>, vector<36x128xbf16>
    %cst = arith.constant dense<0.000000e+00> : vector<8x128xf32>
    %5 = tpu.matmul %3, %4, %cst {dimension_numbers = #tpu.dot_dimension_numbers<[1], [0], [0], [1], [0, 0, 1, 1], [], []>} : vector<8x36xbf16>, vector<36x128xbf16>, vector<8x128xf32> -> vector<8x128xf32>
    %c0_4 = arith.constant 0 : index
    %c0_5 = arith.constant 0 : index
    %6 = vector.load %arg3[%c0_4, %c0_5] : memref<8x128xf32, #tpu.memory_space<vmem>>, vector<8x128xf32>
    tpu.vector_store %arg3[%c0_4, %c0_5], %5 {strides = array<i32>} : memref<8x128xf32, #tpu.memory_space<vmem>>, vector<8x128xf32>,
    %c0_6 = arith.constant 0 : index
    %c0_7 = arith.constant 0 : index
    %7 = vector.load %arg4[%c0_6, %c0_7] : memref<8x1xf32, #tpu.memory_space<vmem>>, vector<8x1xf32>
    %cst_8 = arith.constant dense<0.000000e+00> : vector<8xf32>
    %8 = vector.multi_reduction <add>, %5, %cst_8 [1] : vector<8x128xf32> to vector<8xf32>
    %9 = vector.shape_cast %8 : vector<8xf32> to vector<8x1xf32>
    %10 = arith.addf %7, %9 : vector<8x1xf32>
    %c0_9 = arith.constant 0 : index
    %c0_10 = arith.constant 0 : index
    %11 = vector.load %arg4[%c0_9, %c0_10] : memref<8x1xf32, #tpu.memory_space<vmem>>, vector<8x1xf32>
    tpu.vector_store %arg4[%c0_9, %c0_10], %10 {strides = array<i32>} : memref<8x1xf32, #tpu.memory_space<vmem>>, vector<8x1xf32>,
    %c0_11 = arith.constant 0 : index
    %c0_12 = arith.constant 0 : index
    %12 = vector.load %arg5[%c0_11, %c0_12] : memref<8x1xf32, #tpu.memory_space<vmem>>, vector<8x1xf32>
    %13 = arith.mulf %5, %5 : vector<8x128xf32>
    %cst_13 = arith.constant dense<0.000000e+00> : vector<8xf32>
    %14 = vector.multi_reduction <add>, %13, %cst_13 [1] : vector<8x128xf32> to vector<8xf32>
    %15 = vector.shape_cast %14 : vector<8xf32> to vector<8x1xf32>
    %16 = arith.addf %12, %15 : vector<8x1xf32>
    %c0_14 = arith.constant 0 : index
    %c0_15 = arith.constant 0 : index
    %17 = vector.load %arg5[%c0_14, %c0_15] : memref<8x1xf32, #tpu.memory_space<vmem>>, vector<8x1xf32>
    tpu.vector_store %arg5[%c0_14, %c0_15], %16 {strides = array<i32>} : memref<8x1xf32, #tpu.memory_space<vmem>>, vector<8x1xf32>,
    return
  }
  func.func @transform_0(%arg0: i32) -> (i32, i32) {
    %c0_i32 = arith.constant 0 : i32
    %c0_i32_0 = arith.constant 0 : i32
    %c0_i32_1 = arith.constant 0 : i32
    return %c0_i32, %c0_i32_0 : i32, i32
  }
  func.func @transform_1(%arg0: i32) -> (i32, i32) {
    %c0_i32 = arith.constant 0 : i32
    %c0_i32_0 = arith.constant 0 : i32
    return %c0_i32, %arg0 : i32, i32
  }
  func.func @transform_2(%arg0: i32) -> (i32, i32) {
    %c0_i32 = arith.constant 0 : i32
    %c0_i32_0 = arith.constant 0 : i32
    return %c0_i32, %arg0 : i32, i32
  }
  func.func @transform_3(%arg0: i32) -> (i32, i32) {
    %c0_i32 = arith.constant 0 : i32
    %c0_i32_0 = arith.constant 0 : i32
    %c0_i32_1 = arith.constant 0 : i32
    return %c0_i32, %c0_i32_0 : i32, i32
  }
  func.func @transform_4(%arg0: i32) -> (i32, i32) {
    %c0_i32 = arith.constant 0 : i32
    %c0_i32_0 = arith.constant 0 : i32
    %c0_i32_1 = arith.constant 0 : i32
    return %c0_i32, %c0_i32_0 : i32, i32
  }
}

</mosaic_0001>

<llo_original>
// kernel: tpu_custom_call.1
$region0: #{tpu_custom_call.1}
  #allocation0 [shape = 'u32[]', space=smem, size = 0x4, offset = 0x4, fixed_abs, tag = 'smem constant byte address 0x4 - core index']
  #allocation1 [shape = 'u32[144,128]{1,0:T(1,128)}', space=vmem, size = 0x12000, scoped, tag = 'internal scratch']
  %s0 = inlined_call_operand.hbm [shape: bf16[8,36], index: 0, kind: input, shape index: {}]
  %s1 = inlined_call_operand.hbm [shape: bf16[36,512], index: 1, kind: input, shape index: {}]
  %s2 = inlined_call_operand.hbm [shape: f32[8,512], index: 2, kind: output, shape index: {0}]
  %s3 = inlined_call_operand.vmem [shape: f32[8,1], index: 3, kind: output, shape index: {1}]
  %s4 = inlined_call_operand.vmem [shape: f32[8,1], index: 4, kind: output, shape index: {2}]
  %5 = xla_tuple %s2, %s3, %s4
  %s6 = sld [smem:[#allocation0]]
  $region69: #{tpu_custom_call.1} parent=0
    _
  %s8 = ssub.s32 1, %s6
  %s9 = scalar_select 0, %s8, %s6
  $region1: #{tpu_custom_call.1} parent=0
    #allocation2 [shape = 'u8[2048]{0}', space=vmem, size = 0x800, scoped, tag = 'input window, operand 0, single buffered']
    #allocation3 [shape = 's32[2]{0}', space=sflag, size = 0x8, scoped, tag = 'scoped memory for tpu_custom_call.1']
    #allocation4 [shape = 's32[2]{0}', space=sflag, size = 0x8, scoped, tag = 'scoped memory for tpu_custom_call.1']
    #allocation5 [shape = 'u8[20480]{0}', space=vmem, size = 0x5000, scoped, tag = 'input window, operand 1']
    #allocation6 [shape = 's32[2]{0}', space=sflag, size = 0x8, scoped, tag = 'scoped memory for tpu_custom_call.1']
    #allocation7 [shape = 'u8[8192]{0}', space=vmem, size = 0x2000, scoped, tag = 'output window, operand 0']
    %10 = vsyncpa [#allocation3], 0
    %11 = vsyncpa [#allocation6], 0
    %s12 = scalar_lea.sflag [#allocation6], 1
    %13 = vsyncpa %s12, 0
    %14 = vsyncpa [#allocation4], 0
    %s15 = scalar_lea.sflag [#allocation4], 1
    %16 = vsyncpa %s15, 0
    loop: start=0, step=1, limit=6
    $region2: #{tpu_custom_call.1} parent=1 // loop_pre_header
      _
    $region3: #{tpu_custom_call.1} parent=1 // loop_header
      %s18 = sphi 0, %s22
      %p19 = scmp.ge.s32.totalorder %s18, 6
      %s26 = sphi 0, %s26
      %s28 = sphi 0, %s26
      %s29 = sphi 0, %s28
      %s43 = sphi 0, %s29
      %s49 = sphi 0, %s51
      %s52 = sphi 0, %s49
      %s53 = sphi 0, %s52
      %s69 = sphi 0, %s53
      %s75 = sphi 0, %s77
      %s78 = sphi 0, %s75
      %s79 = sphi 0, %s78
      %s95 = sphi 0, %s79
      %s99 = sphi 0, %s99
      %s101 = sphi 0, %s99
      %s102 = sphi 0, %s101
      %s116 = sphi 0, %s102
      %s120 = sphi 0, %s120
      %s122 = sphi 0, %s120
      %s123 = sphi 0, %s122
      %s137 = sphi 0, %s123
    $region4: #{tpu_custom_call.1} parent=1 // loop_header_branch
      %21 = sbr.rel (%p19) target = $region8
    $region5: #{tpu_custom_call.1} parent=1 // loop_body
      %s23 = ssub.s32 %s18, 1
      %s24 = ssub.s32 %s18, 2
      %s25 = sadd.s32 %s18, 1
      %s27 = sadd.s32 %s26, 1
      %p30 = scmp.eq.s32.totalorder %s18, 3
      %p31 = scmp.ne.s32.totalorder %s26, %s28
      %p32 = scmp.eq.s32.totalorder %s18, 0
      %p33 = por %p31, %p32
      %p34 = scmp.ne.s32.totalorder %s26, %s28
      %p35 = scmp.eq.s32.totalorder %s23, 3
      %p36 = por %p34, %p35
      %p37 = scmp.ne.s32.totalorder %s28, %s29
      %p38 = scmp.eq.s32.totalorder %s23, 0
      %p39 = por %p37, %p38
      %p40 = scmp.ne.s32.totalorder %s28, %s29
      %p41 = scmp.eq.s32.totalorder %s24, 3
      %p42 = por %p40, %p41
      %p44 = scmp.ne.s32.totalorder %s29, %s43
      %p45 = scmp.eq.s32.totalorder %s24, 0
      %p46 = por %p44, %p45
      %s47 = ssub.s32 %s18, %s25
      %p48 = scmp.eq.s32.totalorder %s47, 0
      %s50 = sadd.s32 %s49, 1
      %s51 = scalar_select %p48, %s49, %s50
      %p54 = pneg %p48
      %p55 = scmp.eq.s32.totalorder %s18, 3
      %p56 = por %p54, %p55
      %p57 = scmp.ne.s32.totalorder %s49, %s52
      %p58 = scmp.eq.s32.totalorder %s18, 0
      %p59 = por %p57, %p58
      %p60 = scmp.ne.s32.totalorder %s49, %s52
      %p61 = scmp.eq.s32.totalorder %s23, 3
      %p62 = por %p60, %p61
      %p63 = scmp.ne.s32.totalorder %s52, %s53
      %p64 = scmp.eq.s32.totalorder %s23, 0
      %p65 = por %p63, %p64
      %p66 = scmp.ne.s32.totalorder %s52, %s53
      %p67 = scmp.eq.s32.totalorder %s24, 3
      %p68 = por %p66, %p67
      %p70 = scmp.ne.s32.totalorder %s53, %s69
      %p71 = scmp.eq.s32.totalorder %s24, 0
      %p72 = por %p70, %p71
      %s73 = ssub.s32 %s18, %s25
      %p74 = scmp.eq.s32.totalorder %s73, 0
      %s76 = sadd.s32 %s75, 1
      %s77 = scalar_select %p74, %s75, %s76
      %p80 = pneg %p74
      %p81 = scmp.eq.s32.totalorder %s18, 3
      %p82 = por %p80, %p81
      %p83 = scmp.ne.s32.totalorder %s75, %s78
      %p84 = scmp.eq.s32.totalorder %s18, 0
      %p85 = por %p83, %p84
      %p86 = scmp.ne.s32.totalorder %s75, %s78
      %p87 = scmp.eq.s32.totalorder %s23, 3
      %p88 = por %p86, %p87
      %p89 = scmp.ne.s32.totalorder %s78, %s79
      %p90 = scmp.eq.s32.totalorder %s23, 0
      %p91 = por %p89, %p90
      %p92 = scmp.ne.s32.totalorder %s78, %s79
      %p93 = scmp.eq.s32.totalorder %s24, 3
      %p94 = por %p92, %p93
      %p96 = scmp.ne.s32.totalorder %s79, %s95
      %p97 = scmp.eq.s32.totalorder %s24, 0
      %p98 = por %p96, %p97
      %s100 = sadd.s32 %s99, 1
      %p103 = scmp.eq.s32.totalorder %s18, 3
      %p104 = scmp.ne.s32.totalorder %s99, %s101
      %p105 = scmp.eq.s32.totalorder %s18, 0
      %p106 = por %p104, %p105
      %p107 = scmp.ne.s32.totalorder %s99, %s101
      %p108 = scmp.eq.s32.totalorder %s23, 3
      %p109 = por %p107, %p108
      %p110 = scmp.ne.s32.totalorder %s101, %s102
      %p111 = scmp.eq.s32.totalorder %s23, 0
      %p112 = por %p110, %p111
      %p113 = scmp.ne.s32.totalorder %s101, %s102
      %p114 = scmp.eq.s32.totalorder %s24, 3
      %p115 = por %p113, %p114
      %p117 = scmp.ne.s32.totalorder %s102, %s116
      %p118 = scmp.eq.s32.totalorder %s24, 0
      %p119 = por %p117, %p118
      %s121 = sadd.s32 %s120, 1
      %p124 = scmp.eq.s32.totalorder %s18, 3
      %p125 = scmp.ne.s32.totalorder %s120, %s122
      %p126 = scmp.eq.s32.totalorder %s18, 0
      %p127 = por %p125, %p126
      %p128 = scmp.ne.s32.totalorder %s120, %s122
      %p129 = scmp.eq.s32.totalorder %s23, 3
      %p130 = por %p128, %p129
      %p131 = scmp.ne.s32.totalorder %s122, %s123
      %p132 = scmp.eq.s32.totalorder %s23, 0
      %p133 = por %p131, %p132
      %p134 = scmp.ne.s32.totalorder %s122, %s123
      %p135 = scmp.eq.s32.totalorder %s24, 3
      %p136 = por %p134, %p135
      %p138 = scmp.ne.s32.totalorder %s123, %s137
      %p139 = scmp.eq.s32.totalorder %s24, 0
      %p140 = por %p138, %p139
      %p141 = scmp.le.s32.totalorder 1, %s18
      %p142 = scmp.lt.s32.totalorder %s18, 5
      %p143 = pnand %p141, %p142
      %p144 = pneg %p143
      // Predicated region
      $region9: #{tpu_custom_call.1} parent=5 // pred_check
        _
      $region10: #{tpu_custom_call.1} parent=5 // pred_check_branch
        %146 = sbr.rel (%p143) target = $region12
      $region11: #{tpu_custom_call.1} parent=5 // pred_region
        %s147 = ssub.s32 %s18, 1
        // Predicated region
        $region13: #{tpu_custom_call.1} parent=11 // pred_check
          %p148 = pneg %p39
        $region14: #{tpu_custom_call.1} parent=11 // pred_check_branch
          %150 = sbr.rel (%p148) target = $region16
        $region15: #{tpu_custom_call.1} parent=11 // pred_region
          %s152 = ssub.s32 64, 64
          %153 = vsyncadd [#allocation3], %s152
          %s155 = sshll.u32 [#allocation2], 4
          %s156 = int_to_ptr.vmem [resolvable:$true] %s155
          %158 = dma.hbm_to_vmem [thread:$0]  %s0, 64, %s156, [#allocation3]
        $region16: #{tpu_custom_call.1} parent=11 // pred_fallthru
          _
      $region12: #{tpu_custom_call.1} parent=5 // pred_fallthru
        _
      %p159 = scmp.lt.s32.totalorder %s18, 4
      // Predicated region
      $region17: #{tpu_custom_call.1} parent=5 // pred_check
        %p160 = pneg %p159
      $region18: #{tpu_custom_call.1} parent=5 // pred_check_branch
        %162 = sbr.rel (%p160) target = $region20
      $region19: #{tpu_custom_call.1} parent=5 // pred_region
        // Predicated region
        $region21: #{tpu_custom_call.1} parent=19 // pred_check
          %p163 = pneg %p59
        $region22: #{tpu_custom_call.1} parent=19 // pred_check_branch
          %165 = sbr.rel (%p163) target = $region24
        $region23: #{tpu_custom_call.1} parent=19 // pred_region
          %s166 = sand.u32 %s49, 1
          %s167 = scalar_lea.sflag [#allocation6], %s166
          %s168 = sand.u32 %s49, 1
          %s169 = smul.addr %s168, 20
          %s170 = scalar_lea.vmem [#allocation5], %s169
          %s172 = ssub.s32 320, 320
          %173 = vsyncadd %s167, %s172
          %s174 = smul.addr %s18, 64
          %s175 = scalar_lea.hbm %s1, %s174
          %s176 = sshll.u32 %s170, 4
          %s177 = int_to_ptr.vmem [resolvable:$true] %s176
          %182 = dma.hbm_to_vmem [thread:$0]  %s175, 320, %s177, %s167, 256, 64, 4
        $region24: #{tpu_custom_call.1} parent=19 // pred_fallthru
          _
      $region20: #{tpu_custom_call.1} parent=5 // pred_fallthru
        _
      %p183 = scmp.le.s32.totalorder 1, %s18
      %p184 = scmp.lt.s32.totalorder %s18, 5
      %p185 = pnand %p183, %p184
      %p186 = pneg %p185
      // Predicated region
      $region25: #{tpu_custom_call.1} parent=5 // pred_check
        _
      $region26: #{tpu_custom_call.1} parent=5 // pred_check_branch
        %188 = sbr.rel (%p185) target = $region28
      $region27: #{tpu_custom_call.1} parent=5 // pred_region
        %s189 = ssub.s32 %s18, 1
        // Predicated region
        $region29: #{tpu_custom_call.1} parent=27 // pred_check
          %p190 = pneg %p39
        $region30: #{tpu_custom_call.1} parent=27 // pred_check_branch
          %192 = sbr.rel (%p190) target = $region32
        $region31: #{tpu_custom_call.1} parent=27 // pred_region
          %193 = dma.done [#allocation3], 64
        $region32: #{tpu_custom_call.1} parent=27 // pred_fallthru
          _
        %s194 = sand.u32 %s52, 1
        %s195 = scalar_lea.sflag [#allocation6], %s194
        %s196 = sand.u32 %s52, 1
        %s197 = smul.addr %s196, 20
        %s198 = scalar_lea.vmem [#allocation5], %s197
        // Predicated region
        $region33: #{tpu_custom_call.1} parent=27 // pred_check
          %p199 = pneg %p65
        $region34: #{tpu_custom_call.1} parent=27 // pred_check_branch
          %201 = sbr.rel (%p199) target = $region36
        $region35: #{tpu_custom_call.1} parent=27 // pred_region
          %202 = dma.done %s195, 320
        $region36: #{tpu_custom_call.1} parent=27 // pred_fallthru
          _
        %p203 = pneg %p39
        %p204 = pneg %p36
        %s205 = sand.u32 %s52, 1
        %s206 = scalar_lea.sflag [#allocation6], %s205
        %s207 = sand.u32 %s52, 1
        %s208 = smul.addr %s207, 20
        %s209 = scalar_lea.vmem [#allocation5], %s208
        %p210 = pneg %p65
        %p211 = pneg %p62
        %p212 = pneg %p91
        %p213 = pneg %p88
        %s214 = sand.u32 %s78, 1
        %s215 = scalar_lea.sflag [#allocation4], %s214
        %s216 = sand.u32 %s78, 1
        %s217 = smul.addr %s216, 8
        %s218 = scalar_lea.vmem [#allocation7], %s217
        %p219 = pneg %p112
        %p220 = pneg %p109
        %p221 = pneg %p133
        %p222 = pneg %p130
        %p224 = scmp.eq.s32.totalorder %s23, 0
        // Predicated region
        $region37: #{tpu_custom_call.1} parent=27 // pred_check
          %p225 = pneg %p224
        $region38: #{tpu_custom_call.1} parent=27 // pred_check_branch
          %227 = sbr.rel (%p225) target = $region40
        $region39: #{tpu_custom_call.1} parent=27 // pred_region
          %vm228 = vcmask 7168
          %229 = vst.msk [vmem:[%s3] sm:$0xff] %vm228, 0.0
          %230 = vst.msk [vmem:[%s4] sm:$0xff] %vm228, 0.0
        $region40: #{tpu_custom_call.1} parent=27 // pred_fallthru
          _
        %v231 = vld [vmem:[#allocation2] sm:$0xf]
        %v232 = vld [vmem:[%s198] sm:$0xf]
        %v233 = vld [vmem:[%s198 + $0x4] sm:$0xf]
        %v234 = vld [vmem:[%s198 + $0x8] sm:$0xf]
        %v235 = vld [vmem:[%s198 + $0xc] sm:$0xf]
        %v236 = vld [vmem:[%s198 + $0x10] sm:$0x3]
        %v242 = vunpack.c.l.b16 %v232
        %v243 = vunpack.c.l.b16 %v233
        %v244 = vunpack.c.l.b16 %v234
        %v245 = vunpack.c.l.b16 %v235
        %v246 = vunpack.c.l.b16 %v236
        %v247 = vpack.c.b16 %v243, %v242
        %v248 = vpack.c.b16 %v245, %v244
        %v249 = vpack.c.b16 %v246, %v246
        %vm252 = vcmask 293888
        %v254 = vsel %vm252, %v231, 0
        %vm256 = vcmask 1041408
        %v258 = vsel %vm256, %v249, 0
        %260 = vmatprep.subr.bf16.mxu0 0
        %261 = vmatpush1.bf16.msra.mxu0 %v247
        %262 = vmatprep.subr.bf16.mxu0 0
        %263 = vmatpush1.bf16.msra.mxu0 %v248
        %264 = vmatprep.subr.bf16.mxu0 0
        %265 = vmatpush1.bf16.msra.mxu0 %v258
        %266 = vmatprep.subr.bf16.mxu0 0
        %267 = vmatpush1.bf16.msra.mxu0 0
        %268 = vmatprep.subr.bf16.mxu0 0
        %269 = vmatpush1.bf16.msra.mxu0 0
        %270 = vmatprep.subr.bf16.mxu0 0
        %271 = vmatpush1.bf16.msra.mxu0 0
        %272 = vmatprep.subr.bf16.mxu0 0
        %273 = vmatpush1.bf16.msra.mxu0 0
        %274 = vmatprep.subr.bf16.mxu0 0
        %275 = vmatpush1.bf16.msra.mxu0 0
        %276 = vmatprep.subr.bf16.mxu0 0
        %277 = vmatpush1.bf16.msra.mxu0 0
        %278 = vmatprep.subr.bf16.mxu0 0
        %279 = vmatpush1.bf16.msra.mxu0 0
        %280 = vmatprep.subr.bf16.mxu0 0
        %281 = vmatpush1.bf16.msra.mxu0 0
        %282 = vmatprep.subr.bf16.mxu0 0
        %283 = vmatpush1.bf16.msra.mxu0 0
        %284 = vmatprep.subr.bf16.mxu0 0
        %285 = vmatpush1.bf16.msra.mxu0 0
        %286 = vmatprep.subr.bf16.mxu0 0
        %287 = vmatpush1.bf16.msra.mxu0 0
        %288 = vmatprep.subr.bf16.mxu0 0
        %289 = vmatpush1.bf16.msra.mxu0 0
        %290 = vmatprep.subr.bf16.mxu0 0
        %291 = vmatpush1.bf16.msra.mxu0 0
        %292 = vmatprep.mubr.bf16.mxu0 0
        %293 = vmatmul.mubr.bf16.gmra.mrb[0].mxu0 %v254
        %v294 = vpop.f32.mrb[0].mxu0
        %v295 = vadd.f32 0.0, %v294
        %v296 = vpop.f32.mrb[0].mxu0
        %v297 = vpop.f32.mrb[0].mxu0
        %v298 = vpop.f32.mrb[0].mxu0
        %299 = vdwg.mxu0
        %300 = vst [vmem:[%s218] sm:$0xff] %v295
        %v301 = vld [vmem:[%s3] sm:$0xff]
        %302 = vadd.xlane.f32.xlu0 %v295
        %v303 = vpop.xlane.xlu0 %302
        %v304 = vadd.f32 %v301, %v303
        %vm305 = vcmask 7168
        %306 = vst.msk [vmem:[%s3] sm:$0xff] %vm305, %v304
        %v307 = vld [vmem:[%s4] sm:$0xff]
        %v308 = vmul.f32 %v295, %v295
        %309 = vadd.xlane.f32.xlu0 %v308
        %v310 = vpop.xlane.xlu0 %309
        %v311 = vadd.f32 %v307, %v310
        %312 = vst.msk [vmem:[%s4] sm:$0xff] %vm305, %v311
        %s313 = sand.u32 %s78, 1
        %s314 = scalar_lea.sflag [#allocation4], %s313
        %s315 = sand.u32 %s78, 1
        %s316 = smul.addr %s315, 8
        %s317 = scalar_lea.vmem [#allocation7], %s316
        // Predicated region
        $region41: #{tpu_custom_call.1} parent=27 // pred_check
          %p318 = pneg %p88
        $region42: #{tpu_custom_call.1} parent=27 // pred_check_branch
          %320 = sbr.rel (%p318) target = $region44
        $region43: #{tpu_custom_call.1} parent=27 // pred_region
          %s322 = ssub.s32 128, 128
          %323 = vsyncadd %s314, %s322
          %s324 = smul.addr %s23, 128
          %s325 = scalar_lea.hbm %s2, %s324
          %s327 = sshll.u32 %s317, 4
          %s328 = int_to_ptr.vmem [resolvable:$true] %s327
          %330 = dma.vmem_to_hbm [thread:$0]  %s328, 128, %s325, %s314
        $region44: #{tpu_custom_call.1} parent=27 // pred_fallthru
          _
        // Predicated region
        $region45: #{tpu_custom_call.1} parent=27 // pred_check
          %p331 = pneg %p109
        $region46: #{tpu_custom_call.1} parent=27 // pred_check_branch
          %333 = sbr.rel (%p331) target = $region48
        $region47: #{tpu_custom_call.1} parent=27 // pred_region
          _
        $region48: #{tpu_custom_call.1} parent=27 // pred_fallthru
          _
        // Predicated region
        $region49: #{tpu_custom_call.1} parent=27 // pred_check
          %p334 = pneg %p130
        $region50: #{tpu_custom_call.1} parent=27 // pred_check_branch
          %336 = sbr.rel (%p334) target = $region52
        $region51: #{tpu_custom_call.1} parent=27 // pred_region
          _
        $region52: #{tpu_custom_call.1} parent=27 // pred_fallthru
          _
        // Predicated region
        $region53: #{tpu_custom_call.1} parent=27 // pred_check
          %p337 = pneg %p109
        $region54: #{tpu_custom_call.1} parent=27 // pred_check_branch
          %339 = sbr.rel (%p337) target = $region56
        $region55: #{tpu_custom_call.1} parent=27 // pred_region
          _
        $region56: #{tpu_custom_call.1} parent=27 // pred_fallthru
          _
        // Predicated region
        $region57: #{tpu_custom_call.1} parent=27 // pred_check
          %p340 = pneg %p130
        $region58: #{tpu_custom_call.1} parent=27 // pred_check_branch
          %342 = sbr.rel (%p340) target = $region60
        $region59: #{tpu_custom_call.1} parent=27 // pred_region
          _
        $region60: #{tpu_custom_call.1} parent=27 // pred_fallthru
          _
      $region28: #{tpu_custom_call.1} parent=5 // pred_fallthru
        _
      %p343 = scmp.le.s32.totalorder 2, %s18
      // Predicated region
      $region61: #{tpu_custom_call.1} parent=5 // pred_check
        %p344 = pneg %p343
      $region62: #{tpu_custom_call.1} parent=5 // pred_check_branch
        %346 = sbr.rel (%p344) target = $region64
      $region63: #{tpu_custom_call.1} parent=5 // pred_region
        %s347 = ssub.s32 %s18, 2
        // Predicated region
        $region65: #{tpu_custom_call.1} parent=63 // pred_check
          %p348 = pneg %p94
        $region66: #{tpu_custom_call.1} parent=63 // pred_check_branch
          %350 = sbr.rel (%p348) target = $region68
        $region67: #{tpu_custom_call.1} parent=63 // pred_region
          %s351 = sand.u32 %s79, 1
          %s352 = scalar_lea.sflag [#allocation4], %s351
          %s353 = sand.u32 %s79, 1
          %s354 = smul.addr %s353, 8
          %s355 = scalar_lea.vmem [#allocation7], %s354
          %356 = dma.done %s352, 128
        $region68: #{tpu_custom_call.1} parent=63 // pred_fallthru
          _
      $region64: #{tpu_custom_call.1} parent=5 // pred_fallthru
        _
    $region6: #{tpu_custom_call.1} parent=1 // loop_footer
      %s22 = sadd.s32 1, %s18
    $region7: #{tpu_custom_call.1} parent=1 // loop_footer_branch
      %17 = sbr.rel target = $region3
    $region8: #{tpu_custom_call.1} parent=1 // loop_exit
      _
    %357 = vsyncpa [#allocation3], 1
    %s358 = scalar_lea.sflag [#allocation3], 1
    %359 = vsyncpa %s358, 1
    %360 = vsyncpa [#allocation6], 1
    %s361 = scalar_lea.sflag [#allocation6], 1
    %362 = vsyncpa %s361, 1
    %363 = vsyncpa [#allocation4], 1
    %s364 = scalar_lea.sflag [#allocation4], 1
    %365 = vsyncpa %s364, 1

</llo_original>
